<compile_context>
chip_gen: v6e
topology: v6e:2x2x1
jax: 0.10.0
libtpu: 0.0.40
codegen_flags: <defaults>
</compile_context>

<pallas_src>
import math

import jax
import jax.numpy as jnp
from jax.experimental import pallas as pl
from jax.experimental.pallas import tpu as pltpu

NEG_SLOPE = 0.01          # nn.LeakyReLU default
NORM_EPS = 1e-12          # F.normalize default eps
VMEM_LIMIT = 32 * 1024 * 1024   # <= scoped defaults on v6e/v7x, raises v5e's 16 MiB


def _round_up(x, m):
    return ((x + m - 1) // m) * m


def _leaky_relu(x):
    return jnp.where(x > 0, x, NEG_SLOPE * x)


# ---------------------------------------------------------------------------
# Pallas kernels
# ---------------------------------------------------------------------------
def _aggregator_kernel(a_ref, ego_k_ref, ego_tile_ref, w_ref, b_ref,
                       out_ref, side_acc):
    """Bi-interaction aggregator layer for a tile of tile_m rows, K-tiled.

    grid = (M tiles [parallel], K tiles [arbitrary, last])
      side_acc += A_in[row_tile, k_tile] @ ego[k_tile]          (f32 accumulate)
    at k == last:
      sum_in  = ego_tile + side ; bi_in = ego_tile * side
      pre     = [sum_in | bi_in] @ blockdiag(W1, W2) + [b1 | b2]
      out     = leaky(pre[:, :d_out]) + leaky(pre[:, d_out:])
      out_norm= per-half (re / im) L2-normalised out            (F.normalize)
      store [out | out_norm]  -> one lane-dense (tile_m, 2*d_out) slab
    """
    k = pl.program_id(1)

    @pl.when(k == 0)
    def _():
        side_acc[...] = jnp.zeros_like(side_acc)

    # bf16 x bf16 -> f32 accumulation on the MXU
    side_acc[...] += jnp.dot(a_ref[...], ego_k_ref[...],
                             preferred_element_type=jnp.float32)

    @pl.when(k == pl.num_programs(1) - 1)
    def _():
        side = side_acc[...]                               # (tile_m, d_in) f32
        ego = ego_tile_ref[...].astype(jnp.float32)        # (tile_m, d_in)

        sum_in = ego + side
        bi_in = ego * side
        fused = jnp.concatenate([sum_in, bi_in], axis=1)   # (tile_m, 2*d_in)

        pre = jnp.dot(fused, w_ref[...],
                      preferred_element_type=jnp.float32) + b_ref[...]
        act = _leaky_relu(pre)                             # (tile_m, 2*d_out)

        d_out = act.shape[1] // 2
        out = act[:, :d_out] + act[:, d_out:]              # sum_emb + bi_emb

        # per-row L2 normalisation of the real / imaginary halves, via a lane
        # mask (no slicing / concatenation of sub-128-lane chunks).
        half = d_out // 2
        lane = jax.lax.broadcasted_iota(jnp.int32, out.shape, 1)
        is_re = lane < half
        sq = out * out
        re_ss = jnp.sum(jnp.where(is_re, sq, 0.0), axis=1, keepdims=True)
        im_ss = jnp.sum(jnp.where(is_re, 0.0, sq), axis=1, keepdims=True)
        # rsqrt(max(ss, eps^2)) == 1 / max(||x||, eps)  (F.normalize semantics)
        inv_re = jax.lax.rsqrt(jnp.maximum(re_ss, NORM_EPS * NORM_EPS))
        inv_im = jax.lax.rsqrt(jnp.maximum(im_ss, NORM_EPS * NORM_EPS))
        out_norm = out * jnp.where(is_re, inv_re, inv_im)

        out_ref[...] = jnp.concatenate([out, out_norm], axis=1)


def _score_kernel(u_ref, it_ref, o_ref):
    """cf_score tile = user_embed_tile @ item_embed_T_tile (item pre-transposed)."""
    o_ref[...] = jnp.dot(u_ref[...], it_ref[...],
                         preferred_element_type=jnp.float32)


# ---------------------------------------------------------------------------
# Wrappers
# ---------------------------------------------------------------------------
def _choose_tiles(N, tile_m=256, tile_k=512):
    """Pick (tile_m, tile_k, padded N) honoring the (8, 128) block constraint."""
    n128 = _round_up(N, 128)
    tm = min(tile_m, n128)
    tk = min(tile_k, n128)
    n_pad = _round_up(N, math.lcm(tm, tk))
    return tm, tk, n_pad


def aggregator_layer(A_pad_bf16, ego_pad_bf16, w_bd, b_cat, *, tile_m, tile_k):
    """One bi-interaction aggregator layer on padded bf16 inputs.

    A_pad_bf16   : (N_pad, N_pad) bf16
    ego_pad_bf16 : (N_pad, d_in)  bf16
    w_bd         : (2*d_in, 2*d_out) f32, blockdiag(W1^T, W2^T)
    b_cat        : (1, 2*d_out) f32, [b1 | b2]
    Returns (N_pad, 2*d_out) f32 slab: [:, :d_out] = out, [:, d_out:] = out_norm.
    """
    n_pad, d_in = ego_pad_bf16.shape
    d_out2 = w_bd.shape[1]                       # 2 * d_out
    grid = (n_pad // tile_m, n_pad // tile_k)    # (M parallel, K arbitrary/last)

    return pl.pallas_call(
        _aggregator_kernel,
        out_shape=jax.ShapeDtypeStruct((n_pad, d_out2), jnp.float32),
        grid=grid,
        in_specs=[
            pl.BlockSpec((tile_m, tile_k), lambda i, k: (i, k)),    # A row/col tile
            pl.BlockSpec((tile_k, d_in), lambda i, k: (k, 0)),      # ego K slice
            pl.BlockSpec((tile_m, d_in), lambda i, k: (i, 0)),      # ego row tile
            pl.BlockSpec((2 * d_in, d_out2), lambda i, k: (0, 0)),  # blockdiag W
            pl.BlockSpec((1, d_out2), lambda i, k: (0, 0)),         # [b1 | b2]
        ],
        out_specs=pl.BlockSpec((tile_m, d_out2), lambda i, k: (i, 0)),
        scratch_shapes=[pltpu.VMEM((tile_m, d_in), jnp.float32)],
        compiler_params=pltpu.CompilerParams(
            dimension_semantics=("parallel", "arbitrary"),
            vmem_limit_bytes=VMEM_LIMIT),
    )(A_pad_bf16, ego_pad_bf16, ego_pad_bf16, w_bd, b_cat)


def score_matmul(user_embed, item_embed, *, tile_u=128, tile_i=256):
    """cf_score = user_embed @ item_embed.T, tiled over users x items."""
    n_u, d = user_embed.shape
    n_i = item_embed.shape[0]

    tile_u = min(tile_u, _round_up(n_u, 8))
    tile_i = min(tile_i, _round_up(n_i, 128))
    nu_pad = _round_up(n_u, tile_u)
    ni_pad = _round_up(n_i, tile_i)

    u = user_embed
    if nu_pad != n_u:
        u = jnp.pad(u, ((0, nu_pad - n_u), (0, 0)))
    it_t = item_embed.T                           # (d, n_i): lane-dense output
    if ni_pad != n_i:
        it_t = jnp.pad(it_t, ((0, 0), (0, ni_pad - n_i)))

    out = pl.pallas_call(
        _score_kernel,
        out_shape=jax.ShapeDtypeStruct((nu_pad, ni_pad), jnp.float32),
        grid=(nu_pad // tile_u, ni_pad // tile_i),
        in_specs=[
            pl.BlockSpec((tile_u, d), lambda i, j: (i, 0)),
            pl.BlockSpec((d, tile_i), lambda i, j: (0, j)),
        ],
        out_specs=pl.BlockSpec((tile_u, tile_i), lambda i, j: (i, j)),
        compiler_params=pltpu.CompilerParams(
            dimension_semantics=("parallel", "parallel"),
            vmem_limit_bytes=VMEM_LIMIT),
    )(u, it_t)
    return out[:n_u, :n_i]


def calc_cf_embeddings(entity_user_embed, A_in, layer_params):
    """Mirrors KGAT.calc_cf_embeddings (eval mode, dropout = identity).

    layer_params: list of (w_bd, b_cat, d_out) per aggregator layer.
    """
    N, d0 = entity_user_embed.shape
    tile_m, tile_k, n_pad = _choose_tiles(N)

    # HBM-resident A_in as bf16 (halves the dominant HBM stream); pad once.
    A_bf16 = A_in.astype(jnp.bfloat16)
    if n_pad != N:
        A_bf16 = jnp.pad(A_bf16, ((0, n_pad - N), (0, n_pad - N)))

    ego = entity_user_embed                      # f32 (N, d0)
    half0 = d0 // 2
    all_re = [ego[:, :half0]]
    all_im = [ego[:, half0:]]

    for (w_bd, b_cat, d_out) in layer_params:
        ego_pad = ego
        if n_pad != N:
            ego_pad = jnp.pad(ego_pad, ((0, n_pad - N), (0, 0)))
        fused = aggregator_layer(A_bf16, ego_pad.astype(jnp.bfloat16),
                                 w_bd, b_cat, tile_m=tile_m, tile_k=tile_k)
        fused = fused[:N]
        ego = fused[:, :d_out]                   # un-normalised: next layer input
        ego_norm = fused[:, d_out:]              # per-half normalised
        half = d_out // 2
        all_re.append(ego_norm[:, :half])
        all_im.append(ego_norm[:, half:])

    re_all = jnp.concatenate(all_re, axis=1)
    im_all = jnp.concatenate(all_im, axis=1)
    return re_all, im_all


def kgat_predict(entity_user_embed, A_in, layer_params, user_ids, item_ids):
    """Mirrors KGAT.forward(mode='predict') == calc_score."""
    re_all, im_all = calc_cf_embeddings(entity_user_embed, A_in, layer_params)
    # gather + concat is glue; the hot matmuls run inside Pallas kernels
    user_embed = jnp.concatenate([re_all[user_ids], im_all[user_ids]], axis=1)
    item_embed = jnp.concatenate([re_all[item_ids], im_all[item_ids]], axis=1)
    return score_matmul(user_embed, item_embed)


def make_blockdiag_params(w1, b1, w2, b2):
    """Pack per-layer (W1, b1, W2, b2) into one block-diagonal matmul operand."""
    d_in, d_out = w1.shape
    w_bd = jnp.zeros((2 * d_in, 2 * d_out), jnp.float32)
    w_bd = w_bd.at[:d_in, :d_out].set(w1)
    w_bd = w_bd.at[d_in:, d_out:].set(w2)
    b_cat = jnp.concatenate([b1, b2], axis=1)
    return w_bd, b_cat, d_out


# ---------------------------------------------------------------------------
# Pure-JAX f32 reference (for bf16-tolerance validation)
# ---------------------------------------------------------------------------
def reference_predict(entity_user_embed, A_in, raw_layer_params, user_ids, item_ids):
    ego = entity_user_embed
    half0 = ego.shape[1] // 2
    all_re, all_im = [ego[:, :half0]], [ego[:, half0:]]
    for (w1, b1, w2, b2) in raw_layer_params:
        side = A_in @ ego
        out = _leaky_relu((ego + side) @ w1 + b1) + _leaky_relu((ego * side) @ w2 + b2)
        half = out.shape[1] // 2
        re, im = out[:, :half], out[:, half:]
        re_n = re / jnp.maximum(jnp.linalg.norm(re, axis=1, keepdims=True), NORM_EPS)
        im_n = im / jnp.maximum(jnp.linalg.norm(im, axis=1, keepdims=True), NORM_EPS)
        all_re.append(re_n)
        all_im.append(im_n)
        ego = out
    re_all = jnp.concatenate(all_re, axis=1)
    im_all = jnp.concatenate(all_im, axis=1)
    u = jnp.concatenate([re_all[user_ids], im_all[user_ids]], axis=1)
    it = jnp.concatenate([re_all[item_ids], im_all[item_ids]], axis=1)
    return u @ it.T


# ---------------------------------------------------------------------------
# Deterministic parameter construction
# ---------------------------------------------------------------------------
def xavier_uniform(key, shape):
    fan_out, fan_in = shape[0], shape[1]
    bound = (6.0 / (fan_in + fan_out)) ** 0.5
    return jax.random.uniform(key, shape, jnp.float32, -bound, bound)


if __name__ == "__main__":
    # Small, shape-consistent config
    n_users, n_entities = 32, 96
    N = n_users + n_entities                 # 128 nodes
    embed_dim = 32                           # complex -> stored dim = 64
    conv_dim_list = [embed_dim, 16, 8]       # complex layer dims: 64 -> 32 -> 16

    key = jax.random.PRNGKey(0)
    keys = jax.random.split(key, 16)

    # entity_user_embed.weight : (N, 2*embed_dim), xavier uniform
    entity_user_embed = xavier_uniform(keys[0], (N, 2 * embed_dim))

    # dense, row-softmaxed attention matrix A_in (stand-in for torch.sparse)
    # TODO(synk): real KGAT keeps A_in as torch.sparse; a gather/segment-sum SpMM
    #             kernel (scalar-prefetch indices) would be needed for large graphs.
    A_logits = jax.random.normal(keys[1], (N, N), jnp.float32)
    A_in = jax.nn.softmax(A_logits, axis=1)

    # bi-interaction aggregator layer params (complex => dims doubled)
    raw_layer_params = []
    layer_params = []
    for k in range(len(conv_dim_list) - 1):
        d_in = 2 * conv_dim_list[k]
        d_out = 2 * conv_dim_list[k + 1]
        kw1, kw2, kb1, kb2 = jax.random.split(keys[2 + k], 4)
        # torch Linear weight is (d_out, d_in); store pre-transposed (d_in, d_out)
        w1 = xavier_uniform(kw1, (d_out, d_in)).T
        w2 = xavier_uniform(kw2, (d_out, d_in)).T
        bb = 1.0 / (d_in ** 0.5)
        b1 = jax.random.uniform(kb1, (1, d_out), jnp.float32, -bb, bb)
        b2 = jax.random.uniform(kb2, (1, d_out), jnp.float32, -bb, bb)
        raw_layer_params.append((w1, b1, w2, b2))
        layer_params.append(make_blockdiag_params(w1, b1, w2, b2))

    # query ids
    user_ids = jnp.arange(8, dtype=jnp.int32) + n_entities   # user rows after entities
    item_ids = jnp.arange(16, dtype=jnp.int32)                # first 16 entities

    cf_score = kgat_predict(entity_user_embed, A_in, layer_params,
                            user_ids, item_ids)
    cf_score = jax.block_until_ready(cf_score)

    assert cf_score.shape == (8, 16)
    assert bool(jnp.all(jnp.isfinite(cf_score)))

    # validate bf16-streamed kernel path against the f32 reference
    ref = reference_predict(entity_user_embed, A_in, raw_layer_params,
                            user_ids, item_ids)
    max_abs_diff = float(jnp.max(jnp.abs(cf_score - ref)))
    assert max_abs_diff < 8e-2, f"mismatch vs f32 reference: {max_abs_diff}"

    print("KERNEL_OK")
</pallas_src>

<mosaic_0001>
module attributes {stable_mosaic.version = 11 : i64} {
  func.func @_aggregator_kernel(%arg0: i32, %arg1: i32, %arg2: memref<128x128xbf16, #tpu.memory_space<vmem>>, %arg3: memref<128x64xbf16, #tpu.memory_space<vmem>>, %arg4: memref<128x64xbf16, #tpu.memory_space<vmem>>, %arg5: memref<128x64xf32, #tpu.memory_space<vmem>>, %arg6: memref<1x64xf32, #tpu.memory_space<vmem>>, %arg7: memref<128x64xf32, #tpu.memory_space<vmem>>, %arg8: memref<128x64xf32, #tpu.memory_space<vmem>>) attributes {dimension_semantics = [#tpu.dimension_semantics<parallel>, #tpu.dimension_semantics<arbitrary>], iteration_bounds = array<i64: 1, 1>, scalar_prefetch = 0 : i64, scratch_operands = 1 : i64, tpu.core_type = #tpu.core_type<tc>, window_params = [{transform_indices = @transform_0, window_bounds = array<i64: 128, 128>}, {transform_indices = @transform_1, window_bounds = array<i64: 128, 64>}, {transform_indices = @transform_2, window_bounds = array<i64: 128, 64>}, {pipeline_mode = #tpu.pipeline_mode<synchronous>, transform_indices = @transform_3, window_bounds = array<i64: 128, 64>}, {pipeline_mode = #tpu.pipeline_mode<synchronous>, transform_indices = @transform_4, window_bounds = array<i64: 1, 64>}, {transform_indices = @transform_5, window_bounds = array<i64: 128, 64>}]} {
    %c0_i32 = arith.constant 0 : i32
    %0 = arith.cmpi eq, %arg1, %c0_i32 : i32
    %1 = arith.extui %0 : i1 to i32
    %c0_i32_0 = arith.constant 0 : i32
    %2 = arith.cmpi ne, %1, %c0_i32_0 : i32
    scf.if %2 {
      %cst_10 = arith.constant 0.000000e+00 : f32
      %12 = vector.broadcast %cst_10 : f32 to vector<128x64xf32>
      %c0_11 = arith.constant 0 : index
      %c0_12 = arith.constant 0 : index
      %13 = vector.load %arg8[%c0_11, %c0_12] : memref<128x64xf32, #tpu.memory_space<vmem>>, vector<128x64xf32>
      tpu.vector_store %arg8[%c0_11, %c0_12], %12 {strides = array<i32>} : memref<128x64xf32, #tpu.memory_space<vmem>>, vector<128x64xf32>,
    } else {
    }
    %c0 = arith.constant 0 : index
    %c0_1 = arith.constant 0 : index
    %3 = vector.load %arg8[%c0, %c0_1] : memref<128x64xf32, #tpu.memory_space<vmem>>, vector<128x64xf32>
    %c0_2 = arith.constant 0 : index
    %c0_3 = arith.constant 0 : index
    %4 = vector.load %arg2[%c0_2, %c0_3] : memref<128x128xbf16, #tpu.memory_space<vmem>>, vector<128x128xbf16>
    %c0_4 = arith.constant 0 : index
    %c0_5 = arith.constant 0 : index
    %5 = vector.load %arg3[%c0_4, %c0_5] : memref<128x64xbf16, #tpu.memory_space<vmem>>, vector<128x64xbf16>
    %cst = arith.constant dense<0.000000e+00> : vector<128x64xf32>
    %6 = tpu.matmul %4, %5, %cst {dimension_numbers = #tpu.dot_dimension_numbers<[1], [0], [0], [1], [0, 0, 1, 1], [], []>} : vector<128x128xbf16>, vector<128x64xbf16>, vector<128x64xf32> -> vector<128x64xf32>
    %7 = arith.addf %3, %6 : vector<128x64xf32>
    %c0_6 = arith.constant 0 : index
    %c0_7 = arith.constant 0 : index
    %8 = vector.load %arg8[%c0_6, %c0_7] : memref<128x64xf32, #tpu.memory_space<vmem>>, vector<128x64xf32>
    tpu.vector_store %arg8[%c0_6, %c0_7], %7 {strides = array<i32>} : memref<128x64xf32, #tpu.memory_space<vmem>>, vector<128x64xf32>,
    %c0_i32_8 = arith.constant 0 : i32
    %9 = arith.cmpi eq, %arg1, %c0_i32_8 : i32
    %10 = arith.extui %9 : i1 to i32
    %c0_i32_9 = arith.constant 0 : i32
    %11 = arith.cmpi ne, %10, %c0_i32_9 : i32
    scf.if %11 {
      %c0_10 = arith.constant 0 : index
      %c0_11 = arith.constant 0 : index
      %12 = vector.load %arg8[%c0_10, %c0_11] : memref<128x64xf32, #tpu.memory_space<vmem>>, vector<128x64xf32>
      %c0_12 = arith.constant 0 : index
      %c0_13 = arith.constant 0 : index
      %13 = vector.load %arg4[%c0_12, %c0_13] : memref<128x64xbf16, #tpu.memory_space<vmem>>, vector<128x64xbf16>
      %14 = arith.extf %13 : vector<128x64xbf16> to vector<128x64xf32>
      %15 = arith.addf %14, %12 : vector<128x64xf32>
      %16 = arith.mulf %14, %12 : vector<128x64xf32>
      %17 = tpu.concatenate %15, %16 in 1 : vector<128x64xf32>, vector<128x64xf32> -> vector<128x128xf32>
      %c0_14 = arith.constant 0 : index
      %c0_15 = arith.constant 0 : index
      %18 = vector.load %arg5[%c0_14, %c0_15] : memref<128x64xf32, #tpu.memory_space<vmem>>, vector<128x64xf32>
      %cst_16 = arith.constant dense<0.000000e+00> : vector<128x64xf32>
      %19 = tpu.matmul %17, %18, %cst_16 {dimension_numbers = #tpu.dot_dimension_numbers<[1], [0], [0], [1], [0, 0, 1, 1], [], []>} : vector<128x128xf32>, vector<128x64xf32>, vector<128x64xf32> -> vector<128x64xf32>
      %c0_17 = arith.constant 0 : index
      %c0_18 = arith.constant 0 : index
      %20 = vector.load %arg6[%c0_17, %c0_18] : memref<1x64xf32, #tpu.memory_space<vmem>>, vector<1x64xf32>
      %21 = vector.broadcast %20 : vector<1x64xf32> to vector<128x64xf32>
      %22 = arith.addf %19, %21 : vector<128x64xf32>
      %cst_19 = arith.constant 0.000000e+00 : f32
      %23 = vector.broadcast %cst_19 : f32 to vector<128x64xf32>
      %24 = arith.cmpf ogt, %22, %23 : vector<128x64xf32>
      %cst_20 = arith.constant 0.00999999977 : f32
      %25 = vector.broadcast %cst_20 : f32 to vector<128x64xf32>
      %26 = arith.mulf %25, %22 : vector<128x64xf32>
      %27 = arith.select %24, %22, %26 : vector<128x64xi1>, vector<128x64xf32>
      %28 = vector.extract_strided_slice %27 {offsets = [0, 0], sizes = [128, 32], strides = [1, 1]} : vector<128x64xf32> to vector<128x32xf32>
      %29 = vector.extract_strided_slice %27 {offsets = [0, 32], sizes = [128, 32], strides = [1, 1]} : vector<128x64xf32> to vector<128x32xf32>
      %30 = arith.addf %28, %29 : vector<128x32xf32>
      %31 = tpu.iota {dimensions = array<i32: 1>} : vector<128x32xi32>
      %c16_i32 = arith.constant 16 : i32
      %32 = vector.broadcast %c16_i32 : i32 to vector<128x32xi32>
      %33 = arith.cmpi slt, %31, %32 : vector<128x32xi32>
      %34 = arith.mulf %30, %30 : vector<128x32xf32>
      %cst_21 = arith.constant 0.000000e+00 : f32
      %35 = vector.broadcast %cst_21 : f32 to vector<128x32xf32>
      %36 = arith.select %33, %34, %35 : vector<128x32xi1>, vector<128x32xf32>
      %cst_22 = arith.constant dense<0.000000e+00> : vector<128xf32>
      %37 = vector.multi_reduction <add>, %36, %cst_22 [1] : vector<128x32xf32> to vector<128xf32>
      %38 = vector.shape_cast %37 : vector<128xf32> to vector<128x1xf32>
      %cst_23 = arith.constant 0.000000e+00 : f32
      %39 = vector.broadcast %cst_23 : f32 to vector<128x32xf32>
      %40 = arith.select %33, %39, %34 : vector<128x32xi1>, vector<128x32xf32>
      %cst_24 = arith.constant dense<0.000000e+00> : vector<128xf32>
      %41 = vector.multi_reduction <add>, %40, %cst_24 [1] : vector<128x32xf32> to vector<128xf32>
      %42 = vector.shape_cast %41 : vector<128xf32> to vector<128x1xf32>
      %cst_25 = arith.constant 1.000000e-24 : f32
      %43 = vector.broadcast %cst_25 : f32 to vector<128x1xf32>
      %44 = arith.maximumf %38, %43 : vector<128x1xf32>
      %45 = math.rsqrt %44 : vector<128x1xf32>
      %cst_26 = arith.constant 1.000000e-24 : f32
      %46 = vector.broadcast %cst_26 : f32 to vector<128x1xf32>
      %47 = arith.maximumf %42, %46 : vector<128x1xf32>
      %48 = math.rsqrt %47 : vector<128x1xf32>
      %49 = vector.shape_cast %45 : vector<128x1xf32> to vector<128x1xf32>
      %50 = vector.broadcast %49 : vector<128x1xf32> to vector<128x32xf32>
      %51 = vector.shape_cast %48 : vector<128x1xf32> to vector<128x1xf32>
      %52 = vector.broadcast %51 : vector<128x1xf32> to vector<128x32xf32>
      %53 = arith.select %33, %50, %52 : vector<128x32xi1>, vector<128x32xf32>
      %54 = arith.mulf %30, %53 : vector<128x32xf32>
      %55 = tpu.concatenate %30, %54 in 1 : vector<128x32xf32>, vector<128x32xf32> -> vector<128x64xf32>
      %c0_27 = arith.constant 0 : index
      %c0_28 = arith.constant 0 : index
      %56 = vector.load %arg7[%c0_27, %c0_28] : memref<128x64xf32, #tpu.memory_space<vmem>>, vector<128x64xf32>
      tpu.vector_store %arg7[%c0_27, %c0_28], %55 {strides = array<i32>} : memref<128x64xf32, #tpu.memory_space<vmem>>, vector<128x64xf32>,
    } else {
    }
    return
  }
  func.func @transform_0(%arg0: i32, %arg1: i32) -> (i32, i32) {
    %c0_i32 = arith.constant 0 : i32
    return %arg0, %arg1 : i32, i32
  }
  func.func @transform_1(%arg0: i32, %arg1: i32) -> (i32, i32) {
    %c0_i32 = arith.constant 0 : i32
    %c0_i32_0 = arith.constant 0 : i32
    return %arg1, %c0_i32 : i32, i32
  }
  func.func @transform_2(%arg0: i32, %arg1: i32) -> (i32, i32) {
    %c0_i32 = arith.constant 0 : i32
    %c0_i32_0 = arith.constant 0 : i32
    return %arg0, %c0_i32 : i32, i32
  }
  func.func @transform_3(%arg0: i32, %arg1: i32) -> (i32, i32) {
    %c0_i32 = arith.constant 0 : i32
    %c0_i32_0 = arith.constant 0 : i32
    %c0_i32_1 = arith.constant 0 : i32
    return %c0_i32, %c0_i32_0 : i32, i32
  }
  func.func @transform_4(%arg0: i32, %arg1: i32) -> (i32, i32) {
    %c0_i32 = arith.constant 0 : i32
    %c0_i32_0 = arith.constant 0 : i32
    %c0_i32_1 = arith.constant 0 : i32
    return %c0_i32, %c0_i32_0 : i32, i32
  }
  func.func @transform_5(%arg0: i32, %arg1: i32) -> (i32, i32) {
    %c0_i32 = arith.constant 0 : i32
    %c0_i32_0 = arith.constant 0 : i32
    return %arg0, %c0_i32 : i32, i32
  }
}

</mosaic_0001>

<llo_original>
// kernel: tpu_custom_call.1
$region0: #{tpu_custom_call.1}
  #allocation0 [shape = 'u32[]', space=smem, size = 0x4, offset = 0x4, fixed_abs, tag = 'smem constant byte address 0x4 - core index']
  #allocation1 [shape = 'u32[144,128]{1,0:T(1,128)}', space=vmem, size = 0x12000, scoped, tag = 'internal scratch']
  #allocation2 [shape = 'f32[128,64]{1,0:T(8,128)}', space=vmem, size = 0x10000, scoped, tag = 'scratch operand']
  %s0 = inlined_call_operand.vmem [shape: bf16[128,128], index: 0, kind: input, shape index: {}]
  %s1 = inlined_call_operand.vmem [shape: bf16[128,64], index: 1, kind: input, shape index: {}]
  %s2 = inlined_call_operand.vmem [shape: bf16[128,64], index: 2, kind: input, shape index: {}]
  %s3 = inlined_call_operand.vmem [shape: f32[128,64], index: 3, kind: input, shape index: {}]
  %s4 = inlined_call_operand.vmem [shape: f32[1,64], index: 4, kind: input, shape index: {}]
  %s5 = inlined_call_operand.vmem [shape: f32[128,64], index: 5, kind: output, shape index: {}]
  %s6 = sld [smem:[#allocation0]]
  $region38: #{tpu_custom_call.1} parent=0
    _
  %s8 = ssub.s32 1, %s6
  %s9 = scalar_select 0, %s8, %s6
  // Predicated region
  $region2: #{tpu_custom_call.1} parent=0 // pred_check
    _
  $region3: #{tpu_custom_call.1} parent=0 // pred_check_branch
    %11 = sbr.rel (0) target = $region5
  $region4: #{tpu_custom_call.1} parent=0 // pred_region
    _
  $region5: #{tpu_custom_call.1} parent=0 // pred_fallthru
    _
  // Predicated region
  $region6: #{tpu_custom_call.1} parent=0 // pred_check
    _
  $region7: #{tpu_custom_call.1} parent=0 // pred_check_branch
    %13 = sbr.rel (0) target = $region9
  $region8: #{tpu_custom_call.1} parent=0 // pred_region
    _
  $region9: #{tpu_custom_call.1} parent=0 // pred_fallthru
    _
  // Predicated region
  $region10: #{tpu_custom_call.1} parent=0 // pred_check
    _
  $region11: #{tpu_custom_call.1} parent=0 // pred_check_branch
    %15 = sbr.rel (0) target = $region13
  $region12: #{tpu_custom_call.1} parent=0 // pred_region
    _
  $region13: #{tpu_custom_call.1} parent=0 // pred_fallthru
    _
  // Predicated region
  $region14: #{tpu_custom_call.1} parent=0 // pred_check
    _
  $region15: #{tpu_custom_call.1} parent=0 // pred_check_branch
    %17 = sbr.rel (0) target = $region17
  $region16: #{tpu_custom_call.1} parent=0 // pred_region
    _
  $region17: #{tpu_custom_call.1} parent=0 // pred_fallthru
    _
  // Predicated region
  $region18: #{tpu_custom_call.1} parent=0 // pred_check
    _
  $region19: #{tpu_custom_call.1} parent=0 // pred_check_branch
    %19 = sbr.rel (0) target = $region21
  $region20: #{tpu_custom_call.1} parent=0 // pred_region
    _
  $region21: #{tpu_custom_call.1} parent=0 // pred_fallthru
    _
  %p21 = scmp.eq.s32.totalorder 0, 0
  // Predicated region
  $region22: #{tpu_custom_call.1} parent=0 // pred_check
    %p22 = pneg %p21
  $region23: #{tpu_custom_call.1} parent=0 // pred_check_branch
    %24 = sbr.rel (%p22) target = $region25
  $region24: #{tpu_custom_call.1} parent=0 // pred_region
    %vm25 = vcmask 523264
    %26 = vst.msk [vmem:[#allocation2] sm:$0xff] %vm25, 0.0
    %27 = vst.msk [vmem:[#allocation2 + $0x8] sm:$0xff] %vm25, 0.0
    %28 = vst.msk [vmem:[#allocation2 + $0x10] sm:$0xff] %vm25, 0.0
    %29 = vst.msk [vmem:[#allocation2 + $0x18] sm:$0xff] %vm25, 0.0
    %30 = vst.msk [vmem:[#allocation2 + $0x20] sm:$0xff] %vm25, 0.0
    %31 = vst.msk [vmem:[#allocation2 + $0x28] sm:$0xff] %vm25, 0.0
    %32 = vst.msk [vmem:[#allocation2 + $0x30] sm:$0xff] %vm25, 0.0
    %33 = vst.msk [vmem:[#allocation2 + $0x38] sm:$0xff] %vm25, 0.0
    %34 = vst.msk [vmem:[#allocation2 + $0x40] sm:$0xff] %vm25, 0.0
    %35 = vst.msk [vmem:[#allocation2 + $0x48] sm:$0xff] %vm25, 0.0
    %36 = vst.msk [vmem:[#allocation2 + $0x50] sm:$0xff] %vm25, 0.0
    %37 = vst.msk [vmem:[#allocation2 + $0x58] sm:$0xff] %vm25, 0.0
    %38 = vst.msk [vmem:[#allocation2 + $0x60] sm:$0xff] %vm25, 0.0
    %39 = vst.msk [vmem:[#allocation2 + $0x68] sm:$0xff] %vm25, 0.0
    %40 = vst.msk [vmem:[#allocation2 + $0x70] sm:$0xff] %vm25, 0.0
    %41 = vst.msk [vmem:[#allocation2 + $0x78] sm:$0xff] %vm25, 0.0
  $region25: #{tpu_custom_call.1} parent=0 // pred_fallthru
    _
  %v42 = vld [vmem:[#allocation2] sm:$0xff]
  %v43 = vld [vmem:[#allocation2 + $0x8] sm:$0xff]
  %v44 = vld [vmem:[#allocation2 + $0x10] sm:$0xff]
  %v45 = vld [vmem:[#allocation2 + $0x18] sm:$0xff]
  %v46 = vld [vmem:[#allocation2 + $0x20] sm:$0xff]
  %v47 = vld [vmem:[#allocation2 + $0x28] sm:$0xff]
  %v48 = vld [vmem:[#allocation2 + $0x30] sm:$0xff]
  %v49 = vld [vmem:[#allocation2 + $0x38] sm:$0xff]
  %v50 = vld [vmem:[#allocation2 + $0x40] sm:$0xff]
  %v51 = vld [vmem:[#allocation2 + $0x48] sm:$0xff]
  %v52 = vld [vmem:[#allocation2 + $0x50] sm:$0xff]
  %v53 = vld [vmem:[#allocation2 + $0x58] sm:$0xff]
  %v54 = vld [vmem:[#allocation2 + $0x60] sm:$0xff]
  %v55 = vld [vmem:[#allocation2 + $0x68] sm:$0xff]
  %v56 = vld [vmem:[#allocation2 + $0x70] sm:$0xff]
  %v57 = vld [vmem:[#allocation2 + $0x78] sm:$0xff]
  %v58 = vld [vmem:[%s0] sm:$0xf]
  %v59 = vld [vmem:[%s0 + $0x4] sm:$0xf]
  %v60 = vld [vmem:[%s0 + $0x8] sm:$0xf]
  %v61 = vld [vmem:[%s0 + $0xc] sm:$0xf]
  %v62 = vld [vmem:[%s0 + $0x10] sm:$0xf]
  %v63 = vld [vmem:[%s0 + $0x14] sm:$0xf]
  %v64 = vld [vmem:[%s0 + $0x18] sm:$0xf]
  %v65 = vld [vmem:[%s0 + $0x1c] sm:$0xf]
  %v66 = vld [vmem:[%s0 + $0x20] sm:$0xf]
  %v67 = vld [vmem:[%s0 + $0x24] sm:$0xf]
  %v68 = vld [vmem:[%s0 + $0x28] sm:$0xf]
  %v69 = vld [vmem:[%s0 + $0x2c] sm:$0xf]
  %v70 = vld [vmem:[%s0 + $0x30] sm:$0xf]
  %v71 = vld [vmem:[%s0 + $0x34] sm:$0xf]
  %v72 = vld [vmem:[%s0 + $0x38] sm:$0xf]
  %v73 = vld [vmem:[%s0 + $0x3c] sm:$0xf]
  %v74 = vld [vmem:[%s1] sm:$0xf]
  %v75 = vld [vmem:[%s1 + $0x4] sm:$0xf]
  %v76 = vld [vmem:[%s1 + $0x8] sm:$0xf]
  %v77 = vld [vmem:[%s1 + $0xc] sm:$0xf]
  %v78 = vld [vmem:[%s1 + $0x10] sm:$0xf]
  %v79 = vld [vmem:[%s1 + $0x14] sm:$0xf]
  %v80 = vld [vmem:[%s1 + $0x18] sm:$0xf]
  %v81 = vld [vmem:[%s1 + $0x1c] sm:$0xf]
  %v82 = vld [vmem:[%s1 + $0x20] sm:$0xf]
  %v83 = vld [vmem:[%s1 + $0x24] sm:$0xf]
  %v84 = vld [vmem:[%s1 + $0x28] sm:$0xf]
  %v85 = vld [vmem:[%s1 + $0x2c] sm:$0xf]
  %v86 = vld [vmem:[%s1 + $0x30] sm:$0xf]
  %v87 = vld [vmem:[%s1 + $0x34] sm:$0xf]
  %v88 = vld [vmem:[%s1 + $0x38] sm:$0xf]
  %v89 = vld [vmem:[%s1 + $0x3c] sm:$0xf]
  %v106 = vunpack.c.l.b16 %v58
  %v107 = vunpack.c.l.b16 %v59
  %v108 = vunpack.c.l.b16 %v60
  %v109 = vunpack.c.l.b16 %v61
  %v110 = vunpack.c.l.b16 %v62
  %v111 = vunpack.c.l.b16 %v63
  %v112 = vunpack.c.l.b16 %v64
  %v113 = vunpack.c.l.b16 %v65
  %v114 = vunpack.c.l.b16 %v66
  %v115 = vunpack.c.l.b16 %v67
  %v116 = vunpack.c.l.b16 %v68
  %v117 = vunpack.c.l.b16 %v69
  %v118 = vunpack.c.l.b16 %v70
  %v119 = vunpack.c.l.b16 %v71
  %v120 = vunpack.c.l.b16 %v72
  %v121 = vunpack.c.l.b16 %v73
  %v122 = vpack.c.b16 %v107, %v106
  %v123 = vpack.c.b16 %v109, %v108
  %v124 = vpack.c.b16 %v111, %v110
  %v125 = vpack.c.b16 %v113, %v112
  %v126 = vpack.c.b16 %v115, %v114
  %v127 = vpack.c.b16 %v117, %v116
  %v128 = vpack.c.b16 %v119, %v118
  %v129 = vpack.c.b16 %v121, %v120
  %v154 = vunpack.c.l.b16 %v74
  %v155 = vunpack.c.l.b16 %v75
  %v156 = vunpack.c.l.b16 %v76
  %v157 = vunpack.c.l.b16 %v77
  %v158 = vunpack.c.l.b16 %v78
  %v159 = vunpack.c.l.b16 %v79
  %v160 = vunpack.c.l.b16 %v80
  %v161 = vunpack.c.l.b16 %v81
  %v162 = vunpack.c.l.b16 %v82
  %v163 = vunpack.c.l.b16 %v83
  %v164 = vunpack.c.l.b16 %v84
  %v165 = vunpack.c.l.b16 %v85
  %v166 = vunpack.c.l.b16 %v86
  %v167 = vunpack.c.l.b16 %v87
  %v168 = vunpack.c.l.b16 %v88
  %v169 = vunpack.c.l.b16 %v89
  %v170 = vpack.c.b16 %v155, %v154
  %v171 = vpack.c.b16 %v157, %v156
  %v172 = vpack.c.b16 %v159, %v158
  %v173 = vpack.c.b16 %v161, %v160
  %v174 = vpack.c.b16 %v163, %v162
  %v175 = vpack.c.b16 %v165, %v164
  %v176 = vpack.c.b16 %v167, %v166
  %v177 = vpack.c.b16 %v169, %v168
  %186 = vmatprep.subr.bf16.mxu0 0
  %187 = vmatpush1.bf16.msra.mxu0 %v177
  %188 = vmatprep.subr.bf16.mxu0 0
  %189 = vmatpush1.bf16.msra.mxu0 %v176
  %190 = vmatprep.subr.bf16.mxu0 0
  %191 = vmatpush1.bf16.msra.mxu0 %v175
  %192 = vmatprep.subr.bf16.mxu0 0
  %193 = vmatpush1.bf16.msra.mxu0 %v174
  %194 = vmatprep.subr.bf16.mxu0 0
  %195 = vmatpush1.bf16.msra.mxu0 %v173
  %196 = vmatprep.subr.bf16.mxu0 0
  %197 = vmatpush1.bf16.msra.mxu0 %v172
  %198 = vmatprep.subr.bf16.mxu0 0
  %199 = vmatpush1.bf16.msra.mxu0 %v171
  %200 = vmatprep.subr.bf16.mxu0 0
  %201 = vmatpush1.bf16.msra.mxu0 %v170
  %202 = vmatprep.subr.bf16.mxu0 0
  %203 = vmatpush2.bf16.msra.mxu0 0
  %204 = vmatprep.subr.bf16.mxu0 0
  %205 = vmatpush2.bf16.msra.mxu0 0
  %206 = vmatprep.subr.bf16.mxu0 0
  %207 = vmatpush2.bf16.msra.mxu0 0
  %208 = vmatprep.subr.bf16.mxu0 0
  %209 = vmatpush2.bf16.msra.mxu0 0
  %210 = vmatprep.subr.bf16.mxu0 0
  %211 = vmatpush2.bf16.msra.mxu0 0
  %212 = vmatprep.subr.bf16.mxu0 0
  %213 = vmatpush2.bf16.msra.mxu0 0
  %214 = vmatprep.subr.bf16.mxu0 0
  %215 = vmatpush2.bf16.msra.mxu0 0
  %216 = vmatprep.subr.bf16.mxu0 0
  %217 = vmatpush2.bf16.msra.mxu0 0
  %218 = vmatprep.mubr.bf16.mxu0 0
  %219 = vmatmul.mubr.bf16.gmra.mxu0 %v122
  %v220 = vpop.f32.mrf.mxu0
  %v221 = vadd.f32 0.0, %v220
  %v222 = vpop.f32.mrf.mxu0
  %v223 = vpop.f32.mrf.mxu0
  %v224 = vadd.f32 0.0, %v223
  %v225 = vpop.f32.mrf.mxu0
  %226 = vmatprep.mubr.bf16.mxu0 0
  %227 = vmatmul.mubr.bf16.gmra.mxu0 %v123
  %v228 = vpop.f32.mrf.mxu0
  %v229 = vadd.f32 0.0, %v228
  %v230 = vpop.f32.mrf.mxu0
  %v231 = vpop.f32.mrf.mxu0
  %v232 = vadd.f32 0.0, %v231
  %v233 = vpop.f32.mrf.mxu0
  %234 = vmatprep.mubr.bf16.mxu0 0
  %235 = vmatmul.mubr.bf16.gmra.mxu0 %v124
  %v236 = vpop.f32.mrf.mxu0
  %v237 = vadd.f32 0.0, %v236
  %v238 = vpop.f32.mrf.mxu0
  %v239 = vpop.f32.mrf.mxu0
  %v240 = vadd.f32 0.0, %v239
  %v241 = vpop.f32.mrf.mxu0
  %242 = vmatprep.mubr.bf16.mxu0 0
  %243 = vmatmul.mubr.bf16.gmra.mxu0 %v125
  %v244 = vpop.f32.mrf.mxu0
  %v245 = vadd.f32 0.0, %v244
  %v246 = vpop.f32.mrf.mxu0
  %v247 = vpop.f32.mrf.mxu0
  %v248 = vadd.f32 0.0, %v247
  %v249 = vpop.f32.mrf.mxu0
  %250 = vmatprep.mubr.bf16.mxu0 0
  %251 = vmatmul.mubr.bf16.gmra.mxu0 %v126
  %v252 = vpop.f32.mrf.mxu0
  %v253 = vadd.f32 0.0, %v252
  %v254 = vpop.f32.mrf.mxu0
  %v255 = vpop.f32.mrf.mxu0
  %v256 = vadd.f32 0.0, %v255
  %v257 = vpop.f32.mrf.mxu0
  %258 = vmatprep.mubr.bf16.mxu0 0
  %259 = vmatmul.mubr.bf16.gmra.mxu0 %v127
  %v260 = vpop.f32.mrf.mxu0
  %v261 = vadd.f32 0.0, %v260
  %v262 = vpop.f32.mrf.mxu0
  %v263 = vpop.f32.mrf.mxu0
  %v264 = vadd.f32 0.0, %v263
  %v265 = vpop.f32.mrf.mxu0
  %266 = vmatprep.mubr.bf16.mxu0 0
  %267 = vmatmul.mubr.bf16.gmra.mxu0 %v128
  %v268 = vpop.f32.mrf.mxu0
  %v269 = vadd.f32 0.0, %v268
  %v270 = vpop.f32.mrf.mxu0
  %v271 = vpop.f32.mrf.mxu0
  %v272 = vadd.f32 0.0, %v271
  %v273 = vpop.f32.mrf.mxu0
  %274 = vmatprep.mubr.bf16.mxu0 0
  %275 = vmatmul.mubr.bf16.gmra.mxu0 %v129
  %v276 = vpop.f32.mrf.mxu0
  %v277 = vadd.f32 0.0, %v276
  %v278 = vpop.f32.mrf.mxu0
  %v279 = vpop.f32.mrf.mxu0
  %v280 = vadd.f32 0.0, %v279
  %v281 = vpop.f32.mrf.mxu0
  %282 = vdwg.mxu0
  %v283 = vadd.f32 %v42, %v221
  %v284 = vadd.f32 %v43, %v224
  %v285 = vadd.f32 %v44, %v229
  %v286 = vadd.f32 %v45, %v232
  %v287 = vadd.f32 %v46, %v237
  %v288 = vadd.f32 %v47, %v240
  %v289 = vadd.f32 %v48, %v245
  %v290 = vadd.f32 %v49, %v248
  %v291 = vadd.f32 %v50, %v253
  %v292 = vadd.f32 %v51, %v256
  %v293 = vadd.f32 %v52, %v261
  %v294 = vadd.f32 %v53, %v264
  %v295 = vadd.f32 %v54, %v269
  %v296 = vadd.f32 %v55, %v272
  %v297 = vadd.f32 %v56, %v277
  %v298 = vadd.f32 %v57, %v280
  %vm299 = vcmask 523264
  %300 = vst.msk [vmem:[#allocation2] sm:$0xff] %vm299, %v283
  %301 = vst.msk [vmem:[#allocation2 + $0x8] sm:$0xff] %vm299, %v284
  %302 = vst.msk [vmem:[#allocation2 + $0x10] sm:$0xff] %vm299, %v285
  %303 = vst.msk [vmem:[#allocation2 + $0x18] sm:$0xff] %vm299, %v286
  %304 = vst.msk [vmem:[#allocation2 + $0x20] sm:$0xff] %vm299, %v287
  %305 = vst.msk [vmem:[#allocation2 + $0x28] sm:$0xff] %vm299, %v288
  %306 = vst.msk [vmem:[#allocation2 + $0x30] sm:$0xff] %vm299, %v289
  %307 = vst.msk [vmem:[#allocation2 + $0x38] sm:$0xff] %vm299, %v290
  %308 = vst.msk [vmem:[#allocation2 + $0x40] sm:$0xff] %vm299, %v291
  %309 = vst.msk [vmem:[#allocation2 + $0x48] sm:$0xff] %vm299, %v292
  %310 = vst.msk [vmem:[#allocation2 + $0x50] sm:$0xff] %vm299, %v293
  %311 = vst.msk [vmem:[#allocation2 + $0x58] sm:$0xff] %vm299, %v294
  %312 = vst.msk [vmem:[#allocation2 + $0x60] sm:$0xff] %vm299, %v295
  %313 = vst.msk [vmem:[#allocation2 + $0x68] sm:$0xff] %vm299, %v296
  %314 = vst.msk [vmem:[#allocation2 + $0x70] sm:$0xff] %vm299, %v297
  %315 = vst.msk [vmem:[#allocation2 + $0x78] sm:$0xff] %vm299, %v298
  // Predicated region
  $region26: #{tpu_custom_call.1} parent=0 // pred_check
    %p316 = pneg %p21
  $region27: #{tpu_custom_call.1} parent=0 // pred_check_branch
    %318 = sbr.rel (%p316) target = $region29
  $region28: #{tpu_custom_call.1} parent=0 // pred_region
    %v319 = vld [vmem:[#allocation2] sm:$0xff]
    %v320 = vld [vmem:[#allocation2 + $0x8] sm:$0xff]
    %v321 = vld [vmem:[#allocation2 + $0x10] sm:$0xff]
    %v322 = vld [vmem:[#allocation2 + $0x18] sm:$0xff]
    %v323 = vld [vmem:[#allocation2 + $0x20] sm:$0xff]
    %v324 = vld [vmem:[#allocation2 + $0x28] sm:$0xff]
    %v325 = vld [vmem:[#allocation2 + $0x30] sm:$0xff]
    %v326 = vld [vmem:[#allocation2 + $0x38] sm:$0xff]
    %v327 = vld [vmem:[#allocation2 + $0x40] sm:$0xff]
    %v328 = vld [vmem:[#allocation2 + $0x48] sm:$0xff]
    %v329 = vld [vmem:[#allocation2 + $0x50] sm:$0xff]
    %v330 = vld [vmem:[#allocation2 + $0x58] sm:$0xff]
    %v331 = vld [vmem:[#allocation2 + $0x60] sm:$0xff]
    %v332 = vld [vmem:[#allocation2 + $0x68] sm:$0xff]
    %v333 = vld [vmem:[#allocation2 + $0x70] sm:$0xff]
    %v334 = vld [vmem:[#allocation2 + $0x78] sm:$0xff]
    %v335 = vld [vmem:[%s2] sm:$0xf]
    %v336 = vld [vmem:[%s2 + $0x4] sm:$0xf]
    %v337 = vld [vmem:[%s2 + $0x8] sm:$0xf]
    %v338 = vld [vmem:[%s2 + $0xc] sm:$0xf]
    %v339 = vld [vmem:[%s2 + $0x10] sm:$0xf]
    %v340 = vld [vmem:[%s2 + $0x14] sm:$0xf]
    %v341 = vld [vmem:[%s2 + $0x18] sm:$0xf]
    %v342 = vld [vmem:[%s2 + $0x1c] sm:$0xf]
    %v343 = vld [vmem:[%s2 + $0x20] sm:$0xf]
    %v344 = vld [vmem:[%s2 + $0x24] sm:$0xf]
    %v345 = vld [vmem:[%s2 + $0x28] sm:$0xf]
    %v346 = vld [vmem:[%s2 + $0x2c] sm:$0xf]
    %v347 = vld [vmem:[%s2 + $0x30] sm:$0xf]
    %v348 = vld [vmem:[%s2 + $0x34] sm:$0xf]
    %v349 = vld [vmem:[%s2 + $0x38] sm:$0xf]
    %v350 = vld [vmem:[%s2 + $0x3c] sm:$0xf]
    %v351 = vunpack.c.l.bf16 %v335
    %v352 = vunpack.c.l.bf16 %v336
    %v353 = vunpack.c.l.bf16 %v337
    %v354 = vunpack.c.l.bf16 %v338
    %v355 = vunpack.c.l.bf16 %v339
    %v356 = vunpack.c.l.bf16 %v340
    %v357 = vunpack.c.l.bf16 %v341
    %v358 = vunpack.c.l.bf16 %v342
    %v359 = vunpack.c.l.bf16 %v343
    %v360 = vunpack.c.l.bf16 %v344
    %v361 = vunpack.c.l.bf16 %v345
    %v362 = vunpack.c.l.bf16 %v346
    %v363 = vunpack.c.l.bf16 %v347
    %v364 = vunpack.c.l.bf16 %v348
    %v365 = vunpack.c.l.bf16 %v349
    %v366 = vunpack.c.l.bf16 %v350
    %v367 = vadd.f32 %v351, %v319
    %v368 = vadd.f32 %v352, %v320
    %v369 = vadd.f32 %v353, %v321
    %v370 = vadd.f32 %v354, %v322
    %v371 = vadd.f32 %v355, %v323
    %v372 = vadd.f32 %v356, %v324
    %v373 = vadd.f32 %v357, %v325
    %v374 = vadd.f32 %v358, %v326
    %v375 = vadd.f32 %v359, %v327
    %v376 = vadd.f32 %v360, %v328
    %v377 = vadd.f32 %v361, %v329
    %v378 = vadd.f32 %v362, %v330
    %v379 = vadd.f32 %v363, %v331
    %v380 = vadd.f32 %v364, %v332
    %v381 = vadd.f32 %v365, %v333
    %v382 = vadd.f32 %v366, %v334
    %v383 = vmul.f32 %v351, %v319
    %v384 = vmul.f32 %v352, %v320
    %v385 = vmul.f32 %v353, %v321
    %v386 = vmul.f32 %v354, %v322
    %v387 = vmul.f32 %v355, %v323
    %v388 = vmul.f32 %v356, %v324
    %v389 = vmul.f32 %v357, %v325
    %v390 = vmul.f32 %v358, %v326
    %v391 = vmul.f32 %v359, %v327
    %v392 = vmul.f32 %v360, %v328
    %v393 = vmul.f32 %v361, %v329
    %v394 = vmul.f32 %v362, %v330
    %v395 = vmul.f32 %v363, %v331
    %v396 = vmul.f32 %v364, %v332
    %v397 = vmul.f32 %v365, %v333
    %v398 = vmul.f32 %v366, %v334
    %415 = vrot.lane.b32.xlu0 %v383, 64
    %v416 = vpop.permute.xlu0 %415
    %417 = vrot.lane.b32.xlu0 %v384, 64
    %v418 = vpop.permute.xlu0 %417
    %419 = vrot.lane.b32.xlu0 %v385, 64
    %v420 = vpop.permute.xlu0 %419
    %421 = vrot.lane.b32.xlu0 %v386, 64
    %v422 = vpop.permute.xlu0 %421
    %423 = vrot.lane.b32.xlu0 %v387, 64
    %v424 = vpop.permute.xlu0 %423
    %425 = vrot.lane.b32.xlu0 %v388, 64
    %v426 = vpop.permute.xlu0 %425
    %427 = vrot.lane.b32.xlu0 %v389, 64
    %v428 = vpop.permute.xlu0 %427
    %429 = vrot.lane.b32.xlu0 %v390, 64
    %v430 = vpop.permute.xlu0 %429
    %431 = vrot.lane.b32.xlu0 %v391, 64
    %v432 = vpop.permute.xlu0 %431
    %433 = vrot.lane.b32.xlu0 %v392, 64
    %v434 = vpop.permute.xlu0 %433
    %435 = vrot.lane.b32.xlu0 %v393, 64
    %v436 = vpop.permute.xlu0 %435
    %437 = vrot.lane.b32.xlu0 %v394, 64
    %v438 = vpop.permute.xlu0 %437
    %439 = vrot.lane.b32.xlu0 %v395, 64
    %v440 = vpop.permute.xlu0 %439
    %441 = vrot.lane.b32.xlu0 %v396, 64
    %v442 = vpop.permute.xlu0 %441
    %443 = vrot.lane.b32.xlu0 %v397, 64
    %v444 = vpop.permute.xlu0 %443
    %445 = vrot.lane.b32.xlu0 %v398, 64
    %v446 = vpop.permute.xlu0 %445
    %v463 = vsel %vm299, %v367, %v416
    %v464 = vsel %vm299, %v368, %v418
    %v465 = vsel %vm299, %v369, %v420
    %v466 = vsel %vm299, %v370, %v422
    %v467 = vsel %vm299, %v371, %v424
    %v468 = vsel %vm299, %v372, %v426
    %v469 = vsel %vm299, %v373, %v428
    %v470 = vsel %vm299, %v374, %v430
    %v471 = vsel %vm299, %v375, %v432
    %v472 = vsel %vm299, %v376, %v434
    %v473 = vsel %vm299, %v377, %v436
    %v474 = vsel %vm299, %v378, %v438
    %v475 = vsel %vm299, %v379, %v440
    %v476 = vsel %vm299, %v380, %v442
    %v477 = vsel %vm299, %v381, %v444
    %v478 = vsel %vm299, %v382, %v446
    %v479 = vld [vmem:[%s3] sm:$0xff]
    %v480 = vld [vmem:[%s3 + $0x8] sm:$0xff]
    %v481 = vld [vmem:[%s3 + $0x10] sm:$0xff]
    %v482 = vld [vmem:[%s3 + $0x18] sm:$0xff]
    %v483 = vld [vmem:[%s3 + $0x20] sm:$0xff]
    %v484 = vld [vmem:[%s3 + $0x28] sm:$0xff]
    %v485 = vld [vmem:[%s3 + $0x30] sm:$0xff]
    %v486 = vld [vmem:[%s3 + $0x38] sm:$0xff]
    %v487 = vld [vmem:[%s3 + $0x40] sm:$0xff]
    %v488 = vld [vmem:[%s3 + $0x48] sm:$0xff]
    %v489 = vld [vmem:[%s3 + $0x50] sm:$0xff]
    %v490 = vld [vmem:[%s3 + $0x58] sm:$0xff]
    %v491 = vld [vmem:[%s3 + $0x60] sm:$0xff]
    %v492 = vld [vmem:[%s3 + $0x68] sm:$0xff]
    %v493 = vld [vmem:[%s3 + $0x70] sm:$0xff]
    %v494 = vld [vmem:[%s3 + $0x78] sm:$0xff]
    %v495 = vld [vmem:[%s4] sm:$0x1]
    %v497 = vlaneseq
    %v498 = vshrl.u32 %v497, 7
    %v499 = vsub.s32 0, %v498
    %v500 = vrot.slane %v495, %v499
    %502 = vmatprep.subr.mxu0 0.0
    %503 = vmatpush1.msra.mxu0 %v494
    %504 = vmatprep.subr.mxu0 0.0
    %505 = vmatpush1.msra.mxu0 %v493
    %506 = vmatprep.subr.mxu0 0.0
    %507 = vmatpush1.msra.mxu0 %v492
    %508 = vmatprep.subr.mxu0 0.0
    %509 = vmatpush1.msra.mxu0 %v491
    %510 = vmatprep.subr.mxu0 0.0
    %511 = vmatpush1.msra.mxu0 %v490
    %512 = vmatprep.subr.mxu0 0.0
    %513 = vmatpush1.msra.mxu0 %v489
    %514 = vmatprep.subr.mxu0 0.0
    %515 = vmatpush1.msra.mxu0 %v488
    %516 = vmatprep.subr.mxu0 0.0
    %517 = vmatpush1.msra.mxu0 %v487
    %518 = vmatprep.subr.mxu0 0.0
    %519 = vmatpush1.msra.mxu0 %v486
    %520 = vmatprep.subr.mxu0 0.0
    %521 = vmatpush1.msra.mxu0 %v485
    %522 = vmatprep.subr.mxu0 0.0
    %523 = vmatpush1.msra.mxu0 %v484
    %524 = vmatprep.subr.mxu0 0.0
    %525 = vmatpush1.msra.mxu0 %v483
    %526 = vmatprep.subr.mxu0 0.0
    %527 = vmatpush1.msra.mxu0 %v482
    %528 = vmatprep.subr.mxu0 0.0
    %529 = vmatpush1.msra.mxu0 %v481
    %530 = vmatprep.subr.mxu0 0.0
    %531 = vmatpush1.msra.mxu0 %v480
    %532 = vmatprep.subr.mxu0 0.0
    %533 = vmatpush1.msra.mxu0 %v479
    %534 = vmatprep.subr.mxu0 0.0
    %535 = vmatpush2.msra.mxu0 0.0
    %536 = vmatprep.subr.mxu0 0.0
    %537 = vmatpush2.msra.mxu0 0.0
    %538 = vmatprep.subr.mxu0 0.0
    %539 = vmatpush2.msra.mxu0 0.0
    %540 = vmatprep.subr.mxu0 0.0
    %541 = vmatpush2.msra.mxu0 0.0
    %542 = vmatprep.subr.mxu0 0.0
    %543 = vmatpush2.msra.mxu0 0.0
    %544 = vmatprep.subr.mxu0 0.0
    %545 = vmatpush2.msra.mxu0 0.0
    %546 = vmatprep.subr.mxu0 0.0
    %547 = vmatpush2.msra.mxu0 0.0
    %548 = vmatprep.subr.mxu0 0.0
    %549 = vmatpush2.msra.mxu0 0.0
    %550 = vmatprep.subr.mxu0 0.0
    %551 = vmatpush2.msra.mxu0 0.0
    %552 = vmatprep.subr.mxu0 0.0
    %553 = vmatpush2.msra.mxu0 0.0
    %554 = vmatprep.subr.mxu0 0.0
    %555 = vmatpush2.msra.mxu0 0.0
    %556 = vmatprep.subr.mxu0 0.0
    %557 = vmatpush2.msra.mxu0 0.0
    %558 = vmatprep.subr.mxu0 0.0
    %559 = vmatpush2.msra.mxu0 0.0
    %560 = vmatprep.subr.mxu0 0.0
    %561 = vmatpush2.msra.mxu0 0.0
    %562 = vmatprep.subr.mxu0 0.0
    %563 = vmatpush2.msra.mxu0 0.0
    %564 = vmatprep.subr.mxu0 0.0
    %565 = vmatpush2.msra.mxu0 0.0
    %566 = vmatprep.mubr.f32.mxu0 0.0
    %567 = vmatmul.mubr.f32.gmra.mxu0 %v463
    %v568 = vpop.f32.mrf.mxu0
    %v569 = vadd.f32 %v500, %v568
    %v570 = vpop.f32.mrf.mxu0
    %571 = vmatprep.mubr.f32.mxu0 0.0
    %572 = vmatmul.mubr.f32.gmra.mxu0 %v464
    %v573 = vpop.f32.mrf.mxu0
    %v574 = vadd.f32 %v500, %v573
    %v575 = vpop.f32.mrf.mxu0
    %576 = vmatprep.mubr.f32.mxu0 0.0
    %577 = vmatmul.mubr.f32.gmra.mxu0 %v465
    %v578 = vpop.f32.mrf.mxu0
    %v579 = vadd.f32 %v500, %v578
    %v580 = vpop.f32.mrf.mxu0
    %581 = vmatprep.mubr.f32.mxu0 0.0
    %582 = vmatmul.mubr.f32.gmra.mxu0 %v466
    %v583 = vpop.f32.mrf.mxu0
    %v584 = vadd.f32 %v500, %v583
    %v585 = vpop.f32.mrf.mxu0
    %586 = vmatprep.mubr.f32.mxu0 0.0
    %587 = vmatmul.mubr.f32.gmra.mxu0 %v467
    %v588 = vpop.f32.mrf.mxu0
    %v589 = vadd.f32 %v500, %v588
    %v590 = vpop.f32.mrf.mxu0
    %591 = vmatprep.mubr.f32.mxu0 0.0
    %592 = vmatmul.mubr.f32.gmra.mxu0 %v468
    %v593 = vpop.f32.mrf.mxu0
    %v594 = vadd.f32 %v500, %v593
    %v595 = vpop.f32.mrf.mxu0
    %596 = vmatprep.mubr.f32.mxu0 0.0
    %597 = vmatmul.mubr.f32.gmra.mxu0 %v469
    %v598 = vpop.f32.mrf.mxu0
    %v599 = vadd.f32 %v500, %v598
    %v600 = vpop.f32.mrf.mxu0
    %601 = vmatprep.mubr.f32.mxu0 0.0
    %602 = vmatmul.mubr.f32.gmra.mxu0 %v470
    %v603 = vpop.f32.mrf.mxu0
    %v604 = vadd.f32 %v500, %v603
    %v605 = vpop.f32.mrf.mxu0
    %606 = vmatprep.mubr.f32.mxu0 0.0
    %607 = vmatmul.mubr.f32.gmra.mxu0 %v471
    %v608 = vpop.f32.mrf.mxu0
    %v609 = vadd.f32 %v500, %v608
    %v610 = vpop.f32.mrf.mxu0
    %611 = vmatprep.mubr.f32.mxu0 0.0
    %612 = vmatmul.mubr.f32.gmra.mxu0 %v472
    %v613 = vpop.f32.mrf.mxu0
    %v614 = vadd.f32 %v500, %v613
    %v615 = vpop.f32.mrf.mxu0
    %616 = vmatprep.mubr.f32.mxu0 0.0
    %617 = vmatmul.mubr.f32.gmra.mxu0 %v473
    %v618 = vpop.f32.mrf.mxu0
    %v619 = vadd.f32 %v500, %v618
    %v620 = vpop.f32.mrf.mxu0
    %621 = vmatprep.mubr.f32.mxu0 0.0
    %622 = vmatmul.mubr.f32.gmra.mxu0 %v474
    %v623 = vpop.f32.mrf.mxu0
    %v624 = vadd.f32 %v500, %v623
    %v625 = vpop.f32.mrf.mxu0
    %626 = vmatprep.mubr.f32.mxu0 0.0
    %627 = vmatmul.mubr.f32.gmra.mxu0 %v475
    %v628 = vpop.f32.mrf.mxu0
    %v629 = vadd.f32 %v500, %v628
    %v630 = vpop.f32.mrf.mxu0
    %631 = vmatprep.mubr.f32.mxu0 0.0
    %632 = vmatmul.mubr.f32.gmra.mxu0 %v476
    %v633 = vpop.f32.mrf.mxu0
    %v634 = vadd.f32 %v500, %v633
    %v635 = vpop.f32.mrf.mxu0
    %636 = vmatprep.mubr.f32.mxu0 0.0
    %637 = vmatmul.mubr.f32.gmra.mxu0 %v477
    %v638 = vpop.f32.mrf.mxu0
    %v639 = vadd.f32 %v500, %v638
    %v640 = vpop.f32.mrf.mxu0
    %641 = vmatprep.mubr.f32.mxu0 0.0
    %642 = vmatmul.mubr.f32.gmra.mxu0 %v478
    %v643 = vpop.f32.mrf.mxu0
    %v644 = vadd.f32 %v500, %v643
    %v645 = vpop.f32.mrf.mxu0
    %646 = vdwg.mxu0
    %vm647 = vcmp.gt.f32.partialorder %v569, 0.0
    %vm648 = vcmp.gt.f32.partialorder %v574, 0.0
    %vm649 = vcmp.gt.f32.partialorder %v579, 0.0
    %vm650 = vcmp.gt.f32.partialorder %v584, 0.0
    %vm651 = vcmp.gt.f32.partialorder %v589, 0.0
    %vm652 = vcmp.gt.f32.partialorder %v594, 0.0
    %vm653 = vcmp.gt.f32.partialorder %v599, 0.0
    %vm654 = vcmp.gt.f32.partialorder %v604, 0.0
    %vm655 = vcmp.gt.f32.partialorder %v609, 0.0
    %vm656 = vcmp.gt.f32.partialorder %v614, 0.0
    %vm657 = vcmp.gt.f32.partialorder %v619, 0.0
    %vm658 = vcmp.gt.f32.partialorder %v624, 0.0
    %vm659 = vcmp.gt.f32.partialorder %v629, 0.0
    %vm660 = vcmp.gt.f32.partialorder %v634, 0.0
    %vm661 = vcmp.gt.f32.partialorder %v639, 0.0
    %vm662 = vcmp.gt.f32.partialorder %v644, 0.0
    %v663 = vmul.f32 %v569, 0.01
    %v664 = vmul.f32 %v574, 0.01
    %v665 = vmul.f32 %v579, 0.01
    %v666 = vmul.f32 %v584, 0.01
    %v667 = vmul.f32 %v589, 0.01
    %v668 = vmul.f32 %v594, 0.01
    %v669 = vmul.f32 %v599, 0.01
    %v670 = vmul.f32 %v604, 0.01
    %v671 = vmul.f32 %v609, 0.01
    %v672 = vmul.f32 %v614, 0.01
    %v673 = vmul.f32 %v619, 0.01
    %v674 = vmul.f32 %v624, 0.01
    %v675 = vmul.f32 %v629, 0.01
    %v676 = vmul.f32 %v634, 0.01
    %v677 = vmul.f32 %v639, 0.01
    %v678 = vmul.f32 %v644, 0.01
    %v679 = vsel %vm647, %v569, %v663
    %v680 = vsel %vm648, %v574, %v664
    %v681 = vsel %vm649, %v579, %v665
    %v682 = vsel %vm650, %v584, %v666
    %v683 = vsel %vm651, %v589, %v667
    %v684 = vsel %vm652, %v594, %v668
    %v685 = vsel %vm653, %v599, %v669
    %v686 = vsel %vm654, %v604, %v670
    %v687 = vsel %vm655, %v609, %v671
    %v688 = vsel %vm656, %v614, %v672
    %v689 = vsel %vm657, %v619, %v673
    %v690 = vsel %vm658, %v624, %v674
    %v691 = vsel %vm659, %v629, %v675
    %v692 = vsel %vm660, %v634, %v676
    %v693 = vsel %vm661, %v639, %v677
    %v694 = vsel %vm662, %v644, %v678
    %711 = vrot.lane.b32.xlu0 %v679, 96
    %v712 = vpop.permute.xlu0 %711
    %713 = vrot.lane.b32.xlu0 %v680, 96
    %v714 = vpop.permute.xlu0 %713
    %715 = vrot.lane.b32.xlu0 %v681, 96
    %v716 = vpop.permute.xlu0 %715
    %717 = vrot.lane.b32.xlu0 %v682, 96
    %v718 = vpop.permute.xlu0 %717
    %719 = vrot.lane.b32.xlu0 %v683, 96
    %v720 = vpop.permute.xlu0 %719
    %721 = vrot.lane.b32.xlu0 %v684, 96
    %v722 = vpop.permute.xlu0 %721
    %723 = vrot.lane.b32.xlu0 %v685, 96
    %v724 = vpop.permute.xlu0 %723
    %725 = vrot.lane.b32.xlu0 %v686, 96
    %v726 = vpop.permute.xlu0 %725
    %727 = vrot.lane.b32.xlu0 %v687, 96
    %v728 = vpop.permute.xlu0 %727
    %729 = vrot.lane.b32.xlu0 %v688, 96
    %v730 = vpop.permute.xlu0 %729
    %731 = vrot.lane.b32.xlu0 %v689, 96
    %v732 = vpop.permute.xlu0 %731
    %733 = vrot.lane.b32.xlu0 %v690, 96
    %v734 = vpop.permute.xlu0 %733
    %735 = vrot.lane.b32.xlu0 %v691, 96
    %v736 = vpop.permute.xlu0 %735
    %737 = vrot.lane.b32.xlu0 %v692, 96
    %v738 = vpop.permute.xlu0 %737
    %739 = vrot.lane.b32.xlu0 %v693, 96
    %v740 = vpop.permute.xlu0 %739
    %741 = vrot.lane.b32.xlu0 %v694, 96
    %v742 = vpop.permute.xlu0 %741
    %v759 = vadd.f32 %v679, %v712
    %v760 = vadd.f32 %v680, %v714
    %v761 = vadd.f32 %v681, %v716
    %v762 = vadd.f32 %v682, %v718
    %v763 = vadd.f32 %v683, %v720
    %v764 = vadd.f32 %v684, %v722
    %v765 = vadd.f32 %v685, %v724
    %v766 = vadd.f32 %v686, %v726
    %v767 = vadd.f32 %v687, %v728
    %v768 = vadd.f32 %v688, %v730
    %v769 = vadd.f32 %v689, %v732
    %v770 = vadd.f32 %v690, %v734
    %v771 = vadd.f32 %v691, %v736
    %v772 = vadd.f32 %v692, %v738
    %v773 = vadd.f32 %v693, %v740
    %v774 = vadd.f32 %v694, %v742
    %v775 = vlaneseq
    %v776 = vand.u32 %v775, 127
    %vm777 = vcmp.lt.s32.totalorder %v776, 16
    %v778 = vmul.f32 %v759, %v759
    %v779 = vmul.f32 %v760, %v760
    %v780 = vmul.f32 %v761, %v761
    %v781 = vmul.f32 %v762, %v762
    %v782 = vmul.f32 %v763, %v763
    %v783 = vmul.f32 %v764, %v764
    %v784 = vmul.f32 %v765, %v765
    %v785 = vmul.f32 %v766, %v766
    %v786 = vmul.f32 %v767, %v767
    %v787 = vmul.f32 %v768, %v768
    %v788 = vmul.f32 %v769, %v769
    %v789 = vmul.f32 %v770, %v770
    %v790 = vmul.f32 %v771, %v771
    %v791 = vmul.f32 %v772, %v772
    %v792 = vmul.f32 %v773, %v773
    %v793 = vmul.f32 %v774, %v774
    %v794 = vsel %vm777, %v778, 0.0
    %v795 = vsel %vm777, %v779, 0.0
    %v796 = vsel %vm777, %v780, 0.0
    %v797 = vsel %vm777, %v781, 0.0
    %v798 = vsel %vm777, %v782, 0.0
    %v799 = vsel %vm777, %v783, 0.0
    %v800 = vsel %vm777, %v784, 0.0
    %v801 = vsel %vm777, %v785, 0.0
    %v802 = vsel %vm777, %v786, 0.0
    %v803 = vsel %vm777, %v787, 0.0
    %v804 = vsel %vm777, %v788, 0.0
    %v805 = vsel %vm777, %v789, 0.0
    %v806 = vsel %vm777, %v790, 0.0
    %v807 = vsel %vm777, %v791, 0.0
    %v808 = vsel %vm777, %v792, 0.0
    %v809 = vsel %vm777, %v793, 0.0
    %vm810 = vcmask 261120
    %v811 = vsel %vm810, %v794, 0.0
    %812 = vadd.xlane.f32.xlu0 %v811
    %v813 = vpop.xlane.xlu0 %812
    %v814 = vsel %vm810, %v795, 0.0
    %815 = vadd.xlane.f32.xlu0 %v814
    %v816 = vpop.xlane.xlu0 %815
    %v817 = vsel %vm810, %v796, 0.0
    %818 = vadd.xlane.f32.xlu0 %v817
    %v819 = vpop.xlane.xlu0 %818
    %v820 = vsel %vm810, %v797, 0.0
    %821 = vadd.xlane.f32.xlu0 %v820
    %v822 = vpop.xlane.xlu0 %821
    %v823 = vsel %vm810, %v798, 0.0
    %824 = vadd.xlane.f32.xlu0 %v823
    %v825 = vpop.xlane.xlu0 %824
    %v826 = vsel %vm810, %v799, 0.0
    %827 = vadd.xlane.f32.xlu0 %v826
    %v828 = vpop.xlane.xlu0 %827
    %v829 = vsel %vm810, %v800, 0.0
    %830 = vadd.xlane.f32.xlu0 %v829
    %v831 = vpop.xlane.xlu0 %830
    %v832 = vsel %vm810, %v801, 0.0
    %833 = vadd.xlane.f32.xlu0 %v832
    %v834 = vpop.xlane.xlu0 %833
    %v835 = vsel %vm810, %v802, 0.0
    %836 = vadd.xlane.f32.xlu0 %v835
    %v837 = vpop.xlane.xlu0 %836
    %v838 = vsel %vm810, %v803, 0.0
    %839 = vadd.xlane.f32.xlu0 %v838
    %v840 = vpop.xlane.xlu0 %839
    %v841 = vsel %vm810, %v804, 0.0
    %842 = vadd.xlane.f32.xlu0 %v841
    %v843 = vpop.xlane.xlu0 %842
    %v844 = vsel %vm810, %v805, 0.0
    %845 = vadd.xlane.f32.xlu0 %v844
    %v846 = vpop.xlane.xlu0 %845
    %v847 = vsel %vm810, %v806, 0.0
    %848 = vadd.xlane.f32.xlu0 %v847
    %v849 = vpop.xlane.xlu0 %848
    %v850 = vsel %vm810, %v807, 0.0
    %851 = vadd.xlane.f32.xlu0 %v850
    %v852 = vpop.xlane.xlu0 %851
    %v853 = vsel %vm810, %v808, 0.0
    %854 = vadd.xlane.f32.xlu0 %v853
    %v855 = vpop.xlane.xlu0 %854
    %v856 = vsel %vm810, %v809, 0.0
    %857 = vadd.xlane.f32.xlu0 %v856
    %v858 = vpop.xlane.xlu0 %857
    %v859 = vsel %vm777, 0.0, %v778
    %v860 = vsel %vm777, 0.0, %v779
    %v861 = vsel %vm777, 0.0, %v780
    %v862 = vsel %vm777, 0.0, %v781
    %v863 = vsel %vm777, 0.0, %v782
    %v864 = vsel %vm777, 0.0, %v783
    %v865 = vsel %vm777, 0.0, %v784
    %v866 = vsel %vm777, 0.0, %v785
    %v867 = vsel %vm777, 0.0, %v786
    %v868 = vsel %vm777, 0.0, %v787
    %v869 = vsel %vm777, 0.0, %v788
    %v870 = vsel %vm777, 0.0, %v789
    %v871 = vsel %vm777, 0.0, %v790
    %v872 = vsel %vm777, 0.0, %v791
    %v873 = vsel %vm777, 0.0, %v792
    %v874 = vsel %vm777, 0.0, %v793
    %v875 = vsel %vm810, %v859, 0.0
    %876 = vadd.xlane.f32.xlu0 %v875
    %v877 = vpop.xlane.xlu0 %876
    %v878 = vsel %vm810, %v860, 0.0
    %879 = vadd.xlane.f32.xlu0 %v878
    %v880 = vpop.xlane.xlu0 %879
    %v881 = vsel %vm810, %v861, 0.0
    %882 = vadd.xlane.f32.xlu0 %v881
    %v883 = vpop.xlane.xlu0 %882
    %v884 = vsel %vm810, %v862, 0.0
    %885 = vadd.xlane.f32.xlu0 %v884
    %v886 = vpop.xlane.xlu0 %885
    %v887 = vsel %vm810, %v863, 0.0
    %888 = vadd.xlane.f32.xlu0 %v887
    %v889 = vpop.xlane.xlu0 %888
    %v890 = vsel %vm810, %v864, 0.0
    %891 = vadd.xlane.f32.xlu0 %v890
    %v892 = vpop.xlane.xlu0 %891
    %v893 = vsel %vm810, %v865, 0.0
    %894 = vadd.xlane.f32.xlu0 %v893
    %v895 = vpop.xlane.xlu0 %894
    %v896 = vsel %vm810, %v866, 0.0
    %897 = vadd.xlane.f32.xlu0 %v896
    %v898 = vpop.xlane.xlu0 %897
    %v899 = vsel %vm810, %v867, 0.0
    %900 = vadd.xlane.f32.xlu0 %v899
    %v901 = vpop.xlane.xlu0 %900
    %v902 = vsel %vm810, %v868, 0.0
    %903 = vadd.xlane.f32.xlu0 %v902
    %v904 = vpop.xlane.xlu0 %903
    %v905 = vsel %vm810, %v869, 0.0
    %906 = vadd.xlane.f32.xlu0 %v905
    %v907 = vpop.xlane.xlu0 %906
    %v908 = vsel %vm810, %v870, 0.0
    %909 = vadd.xlane.f32.xlu0 %v908
    %v910 = vpop.xlane.xlu0 %909
    %v911 = vsel %vm810, %v871, 0.0
    %912 = vadd.xlane.f32.xlu0 %v911
    %v913 = vpop.xlane.xlu0 %912
    %v914 = vsel %vm810, %v872, 0.0
    %915 = vadd.xlane.f32.xlu0 %v914
    %v916 = vpop.xlane.xlu0 %915
    %v917 = vsel %vm810, %v873, 0.0
    %918 = vadd.xlane.f32.xlu0 %v917
    %v919 = vpop.xlane.xlu0 %918
    %v920 = vsel %vm810, %v874, 0.0
    %921 = vadd.xlane.f32.xlu0 %v920
    %v922 = vpop.xlane.xlu0 %921
    %v923 = vmax.f32 %v813, 1e-24
    %v924 = vmax.f32 %v816, 1e-24
    %v925 = vmax.f32 %v819, 1e-24
    %v926 = vmax.f32 %v822, 1e-24
    %v927 = vmax.f32 %v825, 1e-24
    %v928 = vmax.f32 %v828, 1e-24
    %v929 = vmax.f32 %v831, 1e-24
    %v930 = vmax.f32 %v834, 1e-24
    %v931 = vmax.f32 %v837, 1e-24
    %v932 = vmax.f32 %v840, 1e-24
    %v933 = vmax.f32 %v843, 1e-24
    %v934 = vmax.f32 %v846, 1e-24
    %v935 = vmax.f32 %v849, 1e-24
    %v936 = vmax.f32 %v852, 1e-24
    %v937 = vmax.f32 %v855, 1e-24
    %v938 = vmax.f32 %v858, 1e-24
    %v939 = vrsqrt.pop %v923
    %v940 = vrsqrt.pop %v924
    %v941 = vrsqrt.pop %v925
    %v942 = vrsqrt.pop %v926
    %v943 = vrsqrt.pop %v927
    %v944 = vrsqrt.pop %v928
    %v945 = vrsqrt.pop %v929
    %v946 = vrsqrt.pop %v930
    %v947 = vrsqrt.pop %v931
    %v948 = vrsqrt.pop %v932
    %v949 = vrsqrt.pop %v933
    %v950 = vrsqrt.pop %v934
    %v951 = vrsqrt.pop %v935
    %v952 = vrsqrt.pop %v936
    %v953 = vrsqrt.pop %v937
    %v954 = vrsqrt.pop %v938
    %v955 = vmax.f32 %v877, 1e-24
    %v956 = vmax.f32 %v880, 1e-24
    %v957 = vmax.f32 %v883, 1e-24
    %v958 = vmax.f32 %v886, 1e-24
    %v959 = vmax.f32 %v889, 1e-24
    %v960 = vmax.f32 %v892, 1e-24
    %v961 = vmax.f32 %v895, 1e-24
    %v962 = vmax.f32 %v898, 1e-24
    %v963 = vmax.f32 %v901, 1e-24
    %v964 = vmax.f32 %v904, 1e-24
    %v965 = vmax.f32 %v907, 1e-24
    %v966 = vmax.f32 %v910, 1e-24
    %v967 = vmax.f32 %v913, 1e-24
    %v968 = vmax.f32 %v916, 1e-24
    %v969 = vmax.f32 %v919, 1e-24
    %v970 = vmax.f32 %v922, 1e-24
    %v971 = vrsqrt.pop %v955
    %v972 = vrsqrt.pop %v956
    %v973 = vrsqrt.pop %v957
    %v974 = vrsqrt.pop %v958
    %v975 = vrsqrt.pop %v959
    %v976 = vrsqrt.pop %v960
    %v977 = vrsqrt.pop %v961
    %v978 = vrsqrt.pop %v962
    %v979 = vrsqrt.pop %v963
    %v980 = vrsqrt.pop %v964
    %v981 = vrsqrt.pop %v965
    %v982 = vrsqrt.pop %v966
    %v983 = vrsqrt.pop %v967
    %v984 = vrsqrt.pop %v968
    %v985 = vrsqrt.pop %v969
    %v986 = vrsqrt.pop %v970
    %v987 = vsel %vm777, %v939, %v971
    %v988 = vsel %vm777, %v940, %v972
    %v989 = vsel %vm777, %v941, %v973
    %v990 = vsel %vm777, %v942, %v974
    %v991 = vsel %vm777, %v943, %v975
    %v992 = vsel %vm777, %v944, %v976
    %v993 = vsel %vm777, %v945, %v977
    %v994 = vsel %vm777, %v946, %v978
    %v995 = vsel %vm777, %v947, %v979
    %v996 = vsel %vm777, %v948, %v980
    %v997 = vsel %vm777, %v949, %v981
    %v998 = vsel %vm777, %v950, %v982
    %v999 = vsel %vm777, %v951, %v983
    %v1000 = vsel %vm777, %v952, %v984
    %v1001 = vsel %vm777, %v953, %v985
    %v1002 = vsel %vm777, %v954, %v986
    %v1003 = vmul.f32 %v759, %v987
    %v1004 = vmul.f32 %v760, %v988
    %v1005 = vmul.f32 %v761, %v989
    %v1006 = vmul.f32 %v762, %v990
    %v1007 = vmul.f32 %v763, %v991
    %v1008 = vmul.f32 %v764, %v992
    %v1009 = vmul.f32 %v765, %v993
    %v1010 = vmul.f32 %v766, %v994
    %v1011 = vmul.f32 %v767, %v995
    %v1012 = vmul.f32 %v768, %v996
    %v1013 = vmul.f32 %v769, %v997
    %v1014 = vmul.f32 %v770, %v998
    %v1015 = vmul.f32 %v771, %v999
    %v1016 = vmul.f32 %v772, %v1000
    %v1017 = vmul.f32 %v773, %v1001
    %v1018 = vmul.f32 %v774, %v1002
    %1035 = vrot.lane.b32.xlu0 %v1003, 32
    %v1036 = vpop.permute.xlu0 %1035
    %1037 = vrot.lane.b32.xlu0 %v1004, 32
    %v1038 = vpop.permute.xlu0 %1037
    %1039 = vrot.lane.b32.xlu0 %v1005, 32
    %v1040 = vpop.permute.xlu0 %1039
    %1041 = vrot.lane.b32.xlu0 %v1006, 32
    %v1042 = vpop.permute.xlu0 %1041
    %1043 = vrot.lane.b32.xlu0 %v1007, 32
    %v1044 = vpop.permute.xlu0 %1043
    %1045 = vrot.lane.b32.xlu0 %v1008, 32
    %v1046 = vpop.permute.xlu0 %1045
    %1047 = vrot.lane.b32.xlu0 %v1009, 32
    %v1048 = vpop.permute.xlu0 %1047
    %1049 = vrot.lane.b32.xlu0 %v1010, 32
    %v1050 = vpop.permute.xlu0 %1049
    %1051 = vrot.lane.b32.xlu0 %v1011, 32
    %v1052 = vpop.permute.xlu0 %1051
    %1053 = vrot.lane.b32.xlu0 %v1012, 32
    %v1054 = vpop.permute.xlu0 %1053
    %1055 = vrot.lane.b32.xlu0 %v1013, 32
    %v1056 = vpop.permute.xlu0 %1055
    %1057 = vrot.lane.b32.xlu0 %v1014, 32
    %v1058 = vpop.permute.xlu0 %1057
    %1059 = vrot.lane.b32.xlu0 %v1015, 32
    %v1060 = vpop.permute.xlu0 %1059
    %1061 = vrot.lane.b32.xlu0 %v1016, 32
    %v1062 = vpop.permute.xlu0 %1061
    %1063 = vrot.lane.b32.xlu0 %v1017, 32
    %v1064 = vpop.permute.xlu0 %1063
    %1065 = vrot.lane.b32.xlu0 %v1018, 32
    %v1066 = vpop.permute.xlu0 %1065
    %v1083 = vsel %vm810, %v759, %v1036
    %v1084 = vsel %vm810, %v760, %v1038
    %v1085 = vsel %vm810, %v761, %v1040
    %v1086 = vsel %vm810, %v762, %v1042
    %v1087 = vsel %vm810, %v763, %v1044
    %v1088 = vsel %vm810, %v764, %v1046
    %v1089 = vsel %vm810, %v765, %v1048
    %v1090 = vsel %vm810, %v766, %v1050
    %v1091 = vsel %vm810, %v767, %v1052
    %v1092 = vsel %vm810, %v768, %v1054
    %v1093 = vsel %vm810, %v769, %v1056
    %v1094 = vsel %vm810, %v770, %v1058
    %v1095 = vsel %vm810, %v771, %v1060
    %v1096 = vsel %vm810, %v772, %v1062
    %v1097 = vsel %vm810, %v773, %v1064
    %v1098 = vsel %vm810, %v774, %v1066
    %1099 = vst.msk [vmem:[%s5] sm:$0xff] %vm299, %v1083
    %1100 = vst.msk [vmem:[%s5 + $0x8] sm:$0xff] %vm299, %v1084
    %1101 = vst.msk [vmem:[%s5 + $0x10] sm:$0xff] %vm299, %v1085
    %1102 = vst.msk [vmem:[%s5 + $0x18] sm:$0xff] %vm299, %v1086
    %1103 = vst.msk [vmem:[%s5 + $0x20] sm:$0xff] %vm299, %v1087
    %1104 = vst.msk [vmem:[%s5 + $0x28] sm:$0xff] %vm299, %v1088
    %1105 = vst.msk [vmem:[%s5 + $0x30] sm:$0xff] %vm299, %v1089
    %1106 = vst.msk [vmem:[%s5 + $0x38] sm:$0xff] %vm299, %v1090
    %1107 = vst.msk [vmem:[%s5 + $0x40] sm:$0xff] %vm299, %v1091
    %1108 = vst.msk [vmem:[%s5 + $0x48] sm:$0xff] %vm299, %v1092
    %1109 = vst.msk [vmem:[%s5 + $0x50] sm:$0xff] %vm299, %v1093
    %1110 = vst.msk [vmem:[%s5 + $0x58] sm:$0xff] %vm299, %v1094
    %1111 = vst.msk [vmem:[%s5 + $0x60] sm:$0xff] %vm299, %v1095
    %1112 = vst.msk [vmem:[%s5 + $0x68] sm:$0xff] %vm299, %v1096
    %1113 = vst.msk [vmem:[%s5 + $0x70] sm:$0xff] %vm299, %v1097
    %1114 = vst.msk [vmem:[%s5 + $0x78] sm:$0xff] %vm299, %v1098
  $region29: #{tpu_custom_call.1} parent=0 // pred_fallthru
    _
  // Predicated region
  $region30: #{tpu_custom_call.1} parent=0 // pred_check
    _
  $region31: #{tpu_custom_call.1} parent=0 // pred_check_branch
    %1116 = sbr.rel (0) target = $region33
  $region32: #{tpu_custom_call.1} parent=0 // pred_region
    _
  $region33: #{tpu_custom_call.1} parent=0 // pred_fallthru
    _
  // Predicated region
  $region34: #{tpu_custom_call.1} parent=0 // pred_check
    _
  $region35: #{tpu_custom_call.1} parent=0 // pred_check_branch
    %1118 = sbr.rel (0) target = $region37
  $region36: #{tpu_custom_call.1} parent=0 // pred_region
    _
  $region37: #{tpu_custom_call.1} parent=0 // pred_fallthru
    _

</llo_original>
